<compile_context>
chip_gen: v5e
topology: v5e:2x2
jax: 0.10.0
libtpu: 0.0.40
codegen_flags: <defaults>
</compile_context>

<pallas_src>
import functools

import jax
import jax.numpy as jnp
from jax.experimental import pallas as pl
from jax.experimental.pallas import tpu as pltpu

_MIB = 1024 * 1024
_LANE = 128
_SUB = 8


def _round_up(x, m):
    return ((x + m - 1) // m) * m


def _tpu_vmem_and_cores():
    """Best-effort (vmem_capacity_bytes, tensorcores_per_chip) for the local TPU."""
    vmem, cores = 128 * _MIB, 1
    try:
        info = pltpu.get_tpu_info()
        v = getattr(info, "vmem_capacity_bytes", None)
        if v:
            vmem = int(v)
        for name in ("num_cores", "num_tensorcores", "tensorcores_per_chip",
                     "cores_per_chip"):
            c = getattr(info, name, None)
            if c:
                cores = int(c)
                break
    except Exception:
        pass
    return vmem, cores


def _self_attention_kernel(qq_ref, qkv_ref, xkv_ref, wq_ref, wk_ref, wv_ref,
                           o_ref, qp_sc, m_sc, l_sc, acc_sc, *,
                           n_valid, mask_keys, approx_recip):
    # Block shapes:
    #   qq_ref           : (block_b, ts, Dp_in)   query rows of this q tile
    #   qkv_ref, xkv_ref : (block_b, ts, Dp_in)   q / x rows of this kv tile
    #   wq_ref : (Dp_in, Dp_k)   wk_ref : (Dp_k, Dp_k)   wv_ref : (Dp_in, Dp_v)
    #   o_ref            : (block_b, ts, Dp_v)
    # Scratch (persists across the kv axis, re-initialised at ki == 0):
    #   qp_sc (block_b, ts, Dp_k), m_sc / l_sc (block_b, ts, 1), acc_sc (block_b, ts, Dp_v)
    ki = pl.program_id(2)
    bt, tq, d_in_p = qq_ref.shape
    tk = qkv_ref.shape[1]
    cdt = qq_ref.dtype  # MXU input dtype (bf16 or f32), chosen by the wrapper.

    @pl.when(ki == 0)
    def _init():
        m_sc[...] = jnp.full(m_sc.shape, -jnp.inf, m_sc.dtype)
        l_sc[...] = jnp.zeros(l_sc.shape, l_sc.dtype)
        acc_sc[...] = jnp.zeros(acc_sc.shape, acc_sc.dtype)
        # Project the query tile once per (batch block, q tile); fold
        # (block_b, ts) into the MXU M dimension (layout-preserving reshape,
        # ts % 8 == 0) so the MXU sees tall, lane-dense tiles.
        q2 = qq_ref[...].reshape(bt * tq, d_in_p)
        qp2 = jnp.dot(q2, wq_ref[...], preferred_element_type=jnp.float32)
        qp_sc[...] = qp2.reshape(bt, tq, -1).astype(qp_sc.dtype)

    # Keys / values for this kv tile.  Keys come from linear_k(linear_q(q)) --
    # the reference module's quirk -- so they are (re)projected per kv tile.
    qk2 = qkv_ref[...].reshape(bt * tk, d_in_p)
    x2 = xkv_ref[...].reshape(bt * tk, d_in_p)
    qpk = jnp.dot(qk2, wq_ref[...], preferred_element_type=jnp.float32)
    kp = jnp.dot(qpk.astype(cdt), wk_ref[...], preferred_element_type=jnp.float32)
    vp = jnp.dot(x2, wv_ref[...], preferred_element_type=jnp.float32)
    kp = kp.reshape(bt, tk, -1).astype(cdt)
    vp = vp.reshape(bt, tk, -1).astype(cdt)

    # Scores: contracted-last-dim batched matmul (no explicit kp.T, designed to
    # lower without an XLU transpose -- check with pl.lower_as_mlir when perf
    # debugging).  No 1/sqrt(dim_k) scaling, matching the reference forward.
    s = jnp.einsum("bnk,bmk->bnm", qp_sc[...], kp,
                   preferred_element_type=jnp.float32)            # (bt, ts, ts)

    if mask_keys:
        # Only the last kv tile can contain padded key positions; the first kv
        # tile always holds >= 1 valid key, so the running max stays finite.
        key_ids = ki * tk + jax.lax.broadcasted_iota(jnp.int32, s.shape, 2)
        s = jnp.where(key_ids < n_valid, s, jnp.float32(-1e30))

    # Online softmax (kept in f32 on every generation; exp runs on the EUP).
    m_prev = m_sc[...]
    m_new = jnp.maximum(m_prev, jnp.max(s, axis=-1, keepdims=True))
    alpha = jnp.exp(m_prev - m_new)
    p = jnp.exp(s - m_new)
    l_sc[...] = alpha * l_sc[...] + jnp.sum(p, axis=-1, keepdims=True)
    acc_sc[...] = alpha * acc_sc[...] + jnp.einsum(
        "bnm,bmv->bnv", p.astype(cdt), vp, preferred_element_type=jnp.float32)
    m_sc[...] = m_new

    @pl.when(ki == pl.num_programs(2) - 1)
    def _finalize():
        inv = pl.reciprocal(l_sc[...], approx=approx_recip)
        o_ref[...] = (acc_sc[...] * inv).astype(o_ref.dtype)


def self_attention(q, x, wq_t, wk_t, wv_t, *,
                   compute_dtype=jnp.bfloat16,
                   block_b=None,
                   seq_tile=None,
                   approx_recip=True,
                   vmem_limit_bytes=None,
                   num_tensorcores=None):
    """q, x: (B, N, dim_in); w*_t: (dim_in, dim_out) = torch weight.T."""
    B, N, dim_in = q.shape
    assert x.shape == (B, N, dim_in)
    dim_k = wq_t.shape[1]
    dim_v = wv_t.shape[1]
    assert wq_t.shape == (dim_in, dim_k)
    assert wk_t.shape == (dim_k, dim_k)
    assert wv_t.shape == (dim_in, dim_v)
    # The reference forward feeds linear_q's output (dim_k wide) straight into
    # linear_k (which expects dim_in inputs), so it only works if dim_k == dim_in.
    assert dim_k == dim_in, "SelfAttention.forward requires dim_k == dim_in (linear_k(linear_q(q)))"

    out_dtype = q.dtype

    # ---- padded feature dims (lane-dense MXU tiles) and sequence tiling ------
    d_in_p = _round_up(max(dim_in, 1), _LANE)
    d_k_p = _round_up(max(dim_k, 1), _LANE)
    d_v_p = _round_up(max(dim_v, 1), _LANE)
    if seq_tile is None:
        ts = min(_LANE, _round_up(max(N, 1), _SUB))   # 128 for large N, N rounded to 8 otherwise
    else:
        ts = _round_up(max(int(seq_tile), _SUB), _SUB)
    n_pad = _round_up(N, ts)
    n_tiles = n_pad // ts
    mask_keys = n_pad > N

    # ---- generation-aware VMEM budget ----------------------------------------
    vmem_cap, n_cores = _tpu_vmem_and_cores()
    if num_tensorcores is not None:
        n_cores = int(num_tensorcores)
    budget = (3 * vmem_cap) // 8                       # ~48 MiB v5e/v6e, ~24 MiB v7x
    if vmem_limit_bytes is None:
        vmem_limit_bytes = int(min(budget + 8 * _MIB, max(vmem_cap - 8 * _MIB, 16 * _MIB)))
    budget = max(min(budget, int(vmem_limit_bytes) - 4 * _MIB), 4 * _MIB)

    asz = jnp.dtype(compute_dtype).itemsize
    osz = jnp.dtype(out_dtype).itemsize

    # Per-step VMEM estimate (bytes).  Weights are block_b-independent; include
    # them double-buffered, plus f32 matmul results and compute-dtype copies.
    w_elems = d_in_p * d_k_p + d_k_p * d_k_p + d_in_p * d_v_p
    fixed = 2 * asz * w_elems
    per_b = (
        2 * asz * ts * d_in_p * 3            # q(query), q(kv), x(kv) blocks, double-buffered
        + 2 * osz * ts * d_v_p               # output block, double-buffered
        + asz * ts * d_k_p                   # qp scratch (compute dtype)
        + 4 * ts * (2 * _LANE + d_v_p)       # m, l (lane-padded) and acc scratch, f32
        + 4 * ts * (2 * d_k_p + d_v_p)       # qp_kv / kp / vp f32 matmul results
        + asz * ts * (d_k_p + d_v_p + ts)    # kp / vp / p compute-dtype copies
        + 2 * 4 * ts * ts                    # scores + exp(scores), f32
    )

    if block_b is None:
        block_b = max(1, (budget - fixed) // per_b)
    block_b = int(max(1, min(B, block_b)))
    # Keep at least `n_cores` batch grid steps so the "parallel" batch axis can
    # be sharded across TensorCores (2 TCs/chip on v7x; no-op on v5e/v6e).
    if n_cores > 1 and B >= n_cores:
        block_b = min(block_b, pl.cdiv(B, n_cores))
    grid_b = pl.cdiv(B, block_b)
    block_b = pl.cdiv(B, grid_b)             # rebalance (e.g. B=5 -> 3+2 not 4+1)
    b_pad = grid_b * block_b

    # Zero-padding is exact: padded weight rows/cols are zero so padded qp/kp/vp
    # columns contribute nothing; padded key rows are masked; padded query/batch
    # rows are sliced off below (and produce finite values, never NaN).
    def pad_act(a):
        return jnp.pad(a, ((0, b_pad - B), (0, n_pad - N), (0, d_in_p - dim_in))
                       ).astype(compute_dtype)

    qz = pad_act(q)
    xz = pad_act(x)
    wqz = jnp.pad(wq_t, ((0, d_in_p - dim_in), (0, d_k_p - dim_k))).astype(compute_dtype)
    wkz = jnp.pad(wk_t, ((0, d_k_p - dim_k), (0, d_k_p - dim_k))).astype(compute_dtype)
    wvz = jnp.pad(wv_t, ((0, d_in_p - dim_in), (0, d_v_p - dim_v))).astype(compute_dtype)

    kernel = functools.partial(_self_attention_kernel, n_valid=N,
                               mask_keys=mask_keys, approx_recip=approx_recip)

    grid_spec = pltpu.PrefetchScalarGridSpec(
        num_scalar_prefetch=0,
        grid=(grid_b, n_tiles, n_tiles),     # (batch blocks, q tiles, kv tiles)
        in_specs=[
            pl.BlockSpec((block_b, ts, d_in_p), lambda b, qi, ki: (b, qi, 0)),  # q, query tile
            pl.BlockSpec((block_b, ts, d_in_p), lambda b, qi, ki: (b, ki, 0)),  # q, kv tile (keys)
            pl.BlockSpec((block_b, ts, d_in_p), lambda b, qi, ki: (b, ki, 0)),  # x, kv tile (values)
            pl.BlockSpec((d_in_p, d_k_p), lambda b, qi, ki: (0, 0)),
            pl.BlockSpec((d_k_p, d_k_p), lambda b, qi, ki: (0, 0)),
            pl.BlockSpec((d_in_p, d_v_p), lambda b, qi, ki: (0, 0)),
        ],
        out_specs=pl.BlockSpec((block_b, ts, d_v_p), lambda b, qi, ki: (b, qi, 0)),
        scratch_shapes=[
            pltpu.VMEM((block_b, ts, d_k_p), compute_dtype),   # projected query tile
            pltpu.VMEM((block_b, ts, 1), jnp.float32),         # running max
            pltpu.VMEM((block_b, ts, 1), jnp.float32),         # running denom
            pltpu.VMEM((block_b, ts, d_v_p), jnp.float32),     # running weighted-V accumulator
        ],
    )

    flops = (2 * B * N * (dim_in * dim_k + dim_k * dim_k + dim_in * dim_v)
             + 2 * B * N * N * (dim_k + dim_v))
    bytes_accessed = ((2 * qz.size + xz.size) * asz
                      + b_pad * n_pad * d_v_p * osz + w_elems * asz)
    cost = pl.CostEstimate(flops=int(flops), transcendentals=int(B * N * N),
                           bytes_accessed=int(bytes_accessed))

    out_padded = pl.pallas_call(
        kernel,
        out_shape=jax.ShapeDtypeStruct((b_pad, n_pad, d_v_p), out_dtype),
        grid_spec=grid_spec,
        compiler_params=pltpu.CompilerParams(
            dimension_semantics=("parallel", "parallel", "arbitrary"),
            vmem_limit_bytes=int(vmem_limit_bytes)),
        cost_estimate=cost,
    )(qz, qz, xz, wqz, wkz, wvz)

    # TODO(synk): for small dim_v the lane-dense (d_v_p=128) output writes ~4x
    # the logical bytes and this slice adds another HBM pass; benchmark a masked
    # (pltpu.store) dim_v-wide store per generation for mem-bound cases.
    return out_padded[:B, :N, :dim_v]


def reference(q, x, wq_t, wk_t, wv_t):
    qp = q @ wq_t
    kp = qp @ wk_t
    vp = x @ wv_t
    dist = jax.nn.softmax(jnp.einsum("bnk,bmk->bnm", qp, kp), axis=-1)
    return jnp.einsum("bnm,bmv->bnv", dist, vp)


if __name__ == "__main__":
    # dim_k == dim_in is required by the reference forward (linear_k(linear_q(q))).
    B, N = 2, 8
    dim_in = dim_k = 32
    dim_v = 32

    key = jax.random.PRNGKey(0)
    kq, kx, k1, k2, k3 = jax.random.split(key, 5)
    q = jax.random.normal(kq, (B, N, dim_in), dtype=jnp.float32)
    x = jax.random.normal(kx, (B, N, dim_in), dtype=jnp.float32)

    # Deterministic weight init mimicking nn.Linear's uniform(-1/sqrt(fan_in), +).
    bound = 1.0 / (dim_in ** 0.5)
    wq = jax.random.uniform(k1, (dim_k, dim_in), jnp.float32, -bound, bound)  # torch layout (out, in)
    wk = jax.random.uniform(k2, (dim_k, dim_k), jnp.float32, -bound, bound)
    wv = jax.random.uniform(k3, (dim_v, dim_in), jnp.float32, -bound, bound)
    wq_t, wk_t, wv_t = wq.T, wk.T, wv.T  # (in, out) layout for the kernel

    ref = reference(q, x, wq_t, wk_t, wv_t)

    # f32 MXU path with exact reciprocal -> tight parity with the reference.
    out_f32 = jax.block_until_ready(
        self_attention(q, x, wq_t, wk_t, wv_t,
                       compute_dtype=jnp.float32, approx_recip=False))
    assert out_f32.shape == (B, N, dim_v)
    assert jnp.allclose(out_f32, ref, atol=2e-4, rtol=2e-4), "f32 path mismatch vs JAX reference"

    # Default bf16 MXU path (f32 softmax, EUP approx reciprocal).  Tolerance is
    # looser: bf16 rounding compounds through the chained linear_k(linear_q(q)).
    out_bf16 = jax.block_until_ready(self_attention(q, x, wq_t, wk_t, wv_t))
    assert out_bf16.shape == (B, N, dim_v)
    assert jnp.allclose(out_bf16, ref, atol=5e-2, rtol=5e-2), "bf16 path mismatch vs JAX reference"

    print("KERNEL_OK")
</pallas_src>

<mosaic_0001>
module attributes {stable_mosaic.version = 11 : i64} {
  func.func @_self_attention_kernel(%arg0: i32, %arg1: i32, %arg2: i32, %arg3: memref<2x8x128xf32, #tpu.memory_space<vmem>>, %arg4: memref<2x8x128xf32, #tpu.memory_space<vmem>>, %arg5: memref<2x8x128xf32, #tpu.memory_space<vmem>>, %arg6: memref<128x128xf32, #tpu.memory_space<vmem>>, %arg7: memref<128x128xf32, #tpu.memory_space<vmem>>, %arg8: memref<128x128xf32, #tpu.memory_space<vmem>>, %arg9: memref<2x8x128xf32, #tpu.memory_space<vmem>>, %arg10: memref<2x8x128xf32, #tpu.memory_space<vmem>>, %arg11: memref<2x8x1xf32, #tpu.memory_space<vmem>>, %arg12: memref<2x8x1xf32, #tpu.memory_space<vmem>>, %arg13: memref<2x8x128xf32, #tpu.memory_space<vmem>>) attributes {dimension_semantics = [#tpu.dimension_semantics<parallel>, #tpu.dimension_semantics<parallel>, #tpu.dimension_semantics<arbitrary>], iteration_bounds = array<i64: 1, 1, 1>, scalar_prefetch = 0 : i64, scratch_operands = 4 : i64, tpu.core_type = #tpu.core_type<tc>, window_params = [{transform_indices = @transform_0, window_bounds = array<i64: 2, 8, 128>}, {transform_indices = @transform_1, window_bounds = array<i64: 2, 8, 128>}, {transform_indices = @transform_2, window_bounds = array<i64: 2, 8, 128>}, {pipeline_mode = #tpu.pipeline_mode<synchronous>, transform_indices = @transform_3, window_bounds = array<i64: 128, 128>}, {pipeline_mode = #tpu.pipeline_mode<synchronous>, transform_indices = @transform_4, window_bounds = array<i64: 128, 128>}, {pipeline_mode = #tpu.pipeline_mode<synchronous>, transform_indices = @transform_5, window_bounds = array<i64: 128, 128>}, {transform_indices = @transform_6, window_bounds = array<i64: 2, 8, 128>}]} {
    %c0_i32 = arith.constant 0 : i32
    %0 = arith.cmpi eq, %arg2, %c0_i32 : i32
    %1 = arith.extui %0 : i1 to i32
    %c0_i32_0 = arith.constant 0 : i32
    %2 = arith.cmpi ne, %1, %c0_i32_0 : i32
    scf.if %2 {
      %cst_41 = arith.constant 0xFF800000 : f32
      %42 = vector.broadcast %cst_41 : f32 to vector<2x8x1xf32>
      %c0_42 = arith.constant 0 : index
      %c0_43 = arith.constant 0 : index
      %c0_44 = arith.constant 0 : index
      %43 = vector.load %arg11[%c0_42, %c0_43, %c0_44] : memref<2x8x1xf32, #tpu.memory_space<vmem>>, vector<2x8x1xf32>
      tpu.vector_store %arg11[%c0_42, %c0_43, %c0_44], %42 {strides = array<i32>} : memref<2x8x1xf32, #tpu.memory_space<vmem>>, vector<2x8x1xf32>,
      %cst_45 = arith.constant 0.000000e+00 : f32
      %44 = vector.broadcast %cst_45 : f32 to vector<2x8x1xf32>
      %c0_46 = arith.constant 0 : index
      %c0_47 = arith.constant 0 : index
      %c0_48 = arith.constant 0 : index
      %45 = vector.load %arg12[%c0_46, %c0_47, %c0_48] : memref<2x8x1xf32, #tpu.memory_space<vmem>>, vector<2x8x1xf32>
      tpu.vector_store %arg12[%c0_46, %c0_47, %c0_48], %44 {strides = array<i32>} : memref<2x8x1xf32, #tpu.memory_space<vmem>>, vector<2x8x1xf32>,
      %cst_49 = arith.constant 0.000000e+00 : f32
      %46 = vector.broadcast %cst_49 : f32 to vector<2x8x128xf32>
      %c0_50 = arith.constant 0 : index
      %c0_51 = arith.constant 0 : index
      %c0_52 = arith.constant 0 : index
      %47 = vector.load %arg13[%c0_50, %c0_51, %c0_52] : memref<2x8x128xf32, #tpu.memory_space<vmem>>, vector<2x8x128xf32>
      tpu.vector_store %arg13[%c0_50, %c0_51, %c0_52], %46 {strides = array<i32>} : memref<2x8x128xf32, #tpu.memory_space<vmem>>, vector<2x8x128xf32>,
      %c0_53 = arith.constant 0 : index
      %c0_54 = arith.constant 0 : index
      %c0_55 = arith.constant 0 : index
      %48 = vector.load %arg3[%c0_53, %c0_54, %c0_55] : memref<2x8x128xf32, #tpu.memory_space<vmem>>, vector<2x8x128xf32>
      %49 = vector.shape_cast %48 : vector<2x8x128xf32> to vector<16x128xf32>
      %c0_56 = arith.constant 0 : index
      %c0_57 = arith.constant 0 : index
      %50 = vector.load %arg6[%c0_56, %c0_57] : memref<128x128xf32, #tpu.memory_space<vmem>>, vector<128x128xf32>
      %cst_58 = arith.constant dense<0.000000e+00> : vector<16x128xf32>
      %51 = tpu.matmul %49, %50, %cst_58 {dimension_numbers = #tpu.dot_dimension_numbers<[1], [0], [0], [1], [0, 0, 1, 1], [], []>} : vector<16x128xf32>, vector<128x128xf32>, vector<16x128xf32> -> vector<16x128xf32>
      %52 = vector.shape_cast %51 : vector<16x128xf32> to vector<2x8x128xf32>
      %c0_59 = arith.constant 0 : index
      %c0_60 = arith.constant 0 : index
      %c0_61 = arith.constant 0 : index
      %53 = vector.load %arg10[%c0_59, %c0_60, %c0_61] : memref<2x8x128xf32, #tpu.memory_space<vmem>>, vector<2x8x128xf32>
      tpu.vector_store %arg10[%c0_59, %c0_60, %c0_61], %52 {strides = array<i32>} : memref<2x8x128xf32, #tpu.memory_space<vmem>>, vector<2x8x128xf32>,
    } else {
    }
    %c0 = arith.constant 0 : index
    %c0_1 = arith.constant 0 : index
    %c0_2 = arith.constant 0 : index
    %3 = vector.load %arg4[%c0, %c0_1, %c0_2] : memref<2x8x128xf32, #tpu.memory_space<vmem>>, vector<2x8x128xf32>
    %4 = vector.shape_cast %3 : vector<2x8x128xf32> to vector<16x128xf32>
    %c0_3 = arith.constant 0 : index
    %c0_4 = arith.constant 0 : index
    %c0_5 = arith.constant 0 : index
    %5 = vector.load %arg5[%c0_3, %c0_4, %c0_5] : memref<2x8x128xf32, #tpu.memory_space<vmem>>, vector<2x8x128xf32>
    %6 = vector.shape_cast %5 : vector<2x8x128xf32> to vector<16x128xf32>
    %c0_6 = arith.constant 0 : index
    %c0_7 = arith.constant 0 : index
    %7 = vector.load %arg6[%c0_6, %c0_7] : memref<128x128xf32, #tpu.memory_space<vmem>>, vector<128x128xf32>
    %cst = arith.constant dense<0.000000e+00> : vector<16x128xf32>
    %8 = tpu.matmul %4, %7, %cst {dimension_numbers = #tpu.dot_dimension_numbers<[1], [0], [0], [1], [0, 0, 1, 1], [], []>} : vector<16x128xf32>, vector<128x128xf32>, vector<16x128xf32> -> vector<16x128xf32>
    %c0_8 = arith.constant 0 : index
    %c0_9 = arith.constant 0 : index
    %9 = vector.load %arg7[%c0_8, %c0_9] : memref<128x128xf32, #tpu.memory_space<vmem>>, vector<128x128xf32>
    %cst_10 = arith.constant dense<0.000000e+00> : vector<16x128xf32>
    %10 = tpu.matmul %8, %9, %cst_10 {dimension_numbers = #tpu.dot_dimension_numbers<[1], [0], [0], [1], [0, 0, 1, 1], [], []>} : vector<16x128xf32>, vector<128x128xf32>, vector<16x128xf32> -> vector<16x128xf32>
    %c0_11 = arith.constant 0 : index
    %c0_12 = arith.constant 0 : index
    %11 = vector.load %arg8[%c0_11, %c0_12] : memref<128x128xf32, #tpu.memory_space<vmem>>, vector<128x128xf32>
    %cst_13 = arith.constant dense<0.000000e+00> : vector<16x128xf32>
    %12 = tpu.matmul %6, %11, %cst_13 {dimension_numbers = #tpu.dot_dimension_numbers<[1], [0], [0], [1], [0, 0, 1, 1], [], []>} : vector<16x128xf32>, vector<128x128xf32>, vector<16x128xf32> -> vector<16x128xf32>
    %13 = vector.shape_cast %10 : vector<16x128xf32> to vector<2x8x128xf32>
    %14 = vector.shape_cast %12 : vector<16x128xf32> to vector<2x8x128xf32>
    %c0_14 = arith.constant 0 : index
    %c0_15 = arith.constant 0 : index
    %c0_16 = arith.constant 0 : index
    %15 = vector.load %arg10[%c0_14, %c0_15, %c0_16] : memref<2x8x128xf32, #tpu.memory_space<vmem>>, vector<2x8x128xf32>
    "tpu.trace_start"() <{level = 10 : i32, message = "bnk,bmk->bnm"}> : () -> ()
    %cst_17 = arith.constant dense<0.000000e+00> : vector<2x8x8xf32>
    %16 = tpu.matmul %15, %13, %cst_17 {dimension_numbers = #tpu.dot_dimension_numbers<[2], [2], [1], [1], [0, 0, 0, 1, 1, 1], [0], [0]>} : vector<2x8x128xf32>, vector<2x8x128xf32>, vector<2x8x8xf32> -> vector<2x8x8xf32>
    "tpu.trace_stop"() : () -> ()
    %c0_18 = arith.constant 0 : index
    %c0_19 = arith.constant 0 : index
    %c0_20 = arith.constant 0 : index
    %17 = vector.load %arg11[%c0_18, %c0_19, %c0_20] : memref<2x8x1xf32, #tpu.memory_space<vmem>>, vector<2x8x1xf32>
    %cst_21 = arith.constant dense<0xFF800000> : vector<2x8xf32>
    %18 = vector.multi_reduction <maximumf>, %16, %cst_21 [2] : vector<2x8x8xf32> to vector<2x8xf32>
    %19 = vector.shape_cast %18 : vector<2x8xf32> to vector<2x8x1xf32>
    %20 = arith.maximumf %17, %19 : vector<2x8x1xf32>
    %21 = arith.subf %17, %20 : vector<2x8x1xf32>
    %22 = math.exp %21 : vector<2x8x1xf32>
    %23 = vector.broadcast %20 : vector<2x8x1xf32> to vector<2x8x8xf32>
    %24 = arith.subf %16, %23 : vector<2x8x8xf32>
    %25 = math.exp %24 : vector<2x8x8xf32>
    %c0_22 = arith.constant 0 : index
    %c0_23 = arith.constant 0 : index
    %c0_24 = arith.constant 0 : index
    %26 = vector.load %arg12[%c0_22, %c0_23, %c0_24] : memref<2x8x1xf32, #tpu.memory_space<vmem>>, vector<2x8x1xf32>
    %27 = arith.mulf %22, %26 : vector<2x8x1xf32>
    %cst_25 = arith.constant dense<0.000000e+00> : vector<2x8xf32>
    %28 = vector.multi_reduction <add>, %25, %cst_25 [2] : vector<2x8x8xf32> to vector<2x8xf32>
    %29 = vector.shape_cast %28 : vector<2x8xf32> to vector<2x8x1xf32>
    %30 = arith.addf %27, %29 : vector<2x8x1xf32>
    %c0_26 = arith.constant 0 : index
    %c0_27 = arith.constant 0 : index
    %c0_28 = arith.constant 0 : index
    %31 = vector.load %arg12[%c0_26, %c0_27, %c0_28] : memref<2x8x1xf32, #tpu.memory_space<vmem>>, vector<2x8x1xf32>
    tpu.vector_store %arg12[%c0_26, %c0_27, %c0_28], %30 {strides = array<i32>} : memref<2x8x1xf32, #tpu.memory_space<vmem>>, vector<2x8x1xf32>,
    %c0_29 = arith.constant 0 : index
    %c0_30 = arith.constant 0 : index
    %c0_31 = arith.constant 0 : index
    %32 = vector.load %arg13[%c0_29, %c0_30, %c0_31] : memref<2x8x128xf32, #tpu.memory_space<vmem>>, vector<2x8x128xf32>
    %33 = vector.broadcast %22 : vector<2x8x1xf32> to vector<2x8x128xf32>
    %34 = arith.mulf %33, %32 : vector<2x8x128xf32>
    "tpu.trace_start"() <{level = 10 : i32, message = "bnm,bmv->bnv"}> : () -> ()
    %cst_32 = arith.constant dense<0.000000e+00> : vector<2x8x128xf32>
    %35 = tpu.matmul %25, %14, %cst_32 {dimension_numbers = #tpu.dot_dimension_numbers<[2], [1], [1], [2], [0, 0, 0, 1, 1, 2], [0], [0]>} : vector<2x8x8xf32>, vector<2x8x128xf32>, vector<2x8x128xf32> -> vector<2x8x128xf32>
    "tpu.trace_stop"() : () -> ()
    %36 = arith.addf %34, %35 : vector<2x8x128xf32>
    %c0_33 = arith.constant 0 : index
    %c0_34 = arith.constant 0 : index
    %c0_35 = arith.constant 0 : index
    %37 = vector.load %arg13[%c0_33, %c0_34, %c0_35] : memref<2x8x128xf32, #tpu.memory_space<vmem>>, vector<2x8x128xf32>
    tpu.vector_store %arg13[%c0_33, %c0_34, %c0_35], %36 {strides = array<i32>} : memref<2x8x128xf32, #tpu.memory_space<vmem>>, vector<2x8x128xf32>,
    %c0_36 = arith.constant 0 : index
    %c0_37 = arith.constant 0 : index
    %c0_38 = arith.constant 0 : index
    %38 = vector.load %arg11[%c0_36, %c0_37, %c0_38] : memref<2x8x1xf32, #tpu.memory_space<vmem>>, vector<2x8x1xf32>
    tpu.vector_store %arg11[%c0_36, %c0_37, %c0_38], %20 {strides = array<i32>} : memref<2x8x1xf32, #tpu.memory_space<vmem>>, vector<2x8x1xf32>,
    %c0_i32_39 = arith.constant 0 : i32
    %39 = arith.cmpi eq, %arg2, %c0_i32_39 : i32
    %40 = arith.extui %39 : i1 to i32
    %c0_i32_40 = arith.constant 0 : i32
    %41 = arith.cmpi ne, %40, %c0_i32_40 : i32
    scf.if %41 {
      %c0_41 = arith.constant 0 : index
      %c0_42 = arith.constant 0 : index
      %c0_43 = arith.constant 0 : index
      %42 = vector.load %arg12[%c0_41, %c0_42, %c0_43] : memref<2x8x1xf32, #tpu.memory_space<vmem>>, vector<2x8x1xf32>
      %43 = tpu.reciprocal %42 : vector<2x8x1xf32> -> vector<2x8x1xf32>
      %c0_44 = arith.constant 0 : index
      %c0_45 = arith.constant 0 : index
      %c0_46 = arith.constant 0 : index
      %44 = vector.load %arg13[%c0_44, %c0_45, %c0_46] : memref<2x8x128xf32, #tpu.memory_space<vmem>>, vector<2x8x128xf32>
      %45 = vector.broadcast %43 : vector<2x8x1xf32> to vector<2x8x128xf32>
      %46 = arith.mulf %44, %45 : vector<2x8x128xf32>
      %c0_47 = arith.constant 0 : index
      %c0_48 = arith.constant 0 : index
      %c0_49 = arith.constant 0 : index
      %47 = vector.load %arg9[%c0_47, %c0_48, %c0_49] : memref<2x8x128xf32, #tpu.memory_space<vmem>>, vector<2x8x128xf32>
      tpu.vector_store %arg9[%c0_47, %c0_48, %c0_49], %46 {strides = array<i32>} : memref<2x8x128xf32, #tpu.memory_space<vmem>>, vector<2x8x128xf32>,
    } else {
    }
    return
  }
  func.func @transform_0(%arg0: i32, %arg1: i32, %arg2: i32) -> (i32, i32, i32) {
    %c0_i32 = arith.constant 0 : i32
    %c0_i32_0 = arith.constant 0 : i32
    return %arg0, %arg1, %c0_i32 : i32, i32, i32
  }
  func.func @transform_1(%arg0: i32, %arg1: i32, %arg2: i32) -> (i32, i32, i32) {
    %c0_i32 = arith.constant 0 : i32
    %c0_i32_0 = arith.constant 0 : i32
    return %arg0, %arg2, %c0_i32 : i32, i32, i32
  }
  func.func @transform_2(%arg0: i32, %arg1: i32, %arg2: i32) -> (i32, i32, i32) {
    %c0_i32 = arith.constant 0 : i32
    %c0_i32_0 = arith.constant 0 : i32
    return %arg0, %arg2, %c0_i32 : i32, i32, i32
  }
  func.func @transform_3(%arg0: i32, %arg1: i32, %arg2: i32) -> (i32, i32) {
    %c0_i32 = arith.constant 0 : i32
    %c0_i32_0 = arith.constant 0 : i32
    %c0_i32_1 = arith.constant 0 : i32
    return %c0_i32, %c0_i32_0 : i32, i32
  }
  func.func @transform_4(%arg0: i32, %arg1: i32, %arg2: i32) -> (i32, i32) {
    %c0_i32 = arith.constant 0 : i32
    %c0_i32_0 = arith.constant 0 : i32
    %c0_i32_1 = arith.constant 0 : i32
    return %c0_i32, %c0_i32_0 : i32, i32
  }
  func.func @transform_5(%arg0: i32, %arg1: i32, %arg2: i32) -> (i32, i32) {
    %c0_i32 = arith.constant 0 : i32
    %c0_i32_0 = arith.constant 0 : i32
    %c0_i32_1 = arith.constant 0 : i32
    return %c0_i32, %c0_i32_0 : i32, i32
  }
  func.func @transform_6(%arg0: i32, %arg1: i32, %arg2: i32) -> (i32, i32, i32) {
    %c0_i32 = arith.constant 0 : i32
    %c0_i32_0 = arith.constant 0 : i32
    return %arg0, %arg1, %c0_i32 : i32, i32, i32
  }
}

</mosaic_0001>

<llo_original>
// kernel: tpu_custom_call.1
$region0: #{tpu_custom_call.1}
  #allocation0 [shape = 'u32[]', space=smem, size = 0x4, offset = 0x4, fixed_abs, tag = 'smem constant byte address 0x4 - core index']
  #allocation1 [shape = 'u32[72,128]{1,0:T(1,128)}', space=vmem, size = 0x9000, scoped, tag = 'internal scratch']
  #allocation2 [shape = 'f32[2,8,128]{2,1,0:T(8,128)}', space=vmem, size = 0x2000, scoped, tag = 'scratch operand']
  #allocation3 [shape = 'f32[2,8,1]{2,1,0:T(8,128)}', space=vmem, size = 0x2000, scoped, tag = 'scratch operand']
  #allocation4 [shape = 'f32[2,8,1]{2,1,0:T(8,128)}', space=vmem, size = 0x2000, scoped, tag = 'scratch operand']
  #allocation5 [shape = 'f32[2,8,128]{2,1,0:T(8,128)}', space=vmem, size = 0x2000, scoped, tag = 'scratch operand']
  %s0 = inlined_call_operand.hbm [shape: f32[2,8,128], index: 0, kind: input, shape index: {}]
  %s1 = inlined_call_operand.hbm [shape: f32[2,8,128], index: 1, kind: input, shape index: {}]
  %s2 = inlined_call_operand.hbm [shape: f32[2,8,128], index: 2, kind: input, shape index: {}]
  %s3 = inlined_call_operand.hbm [shape: f32[128,128], index: 3, kind: input, shape index: {}]
  %s4 = inlined_call_operand.hbm [shape: f32[128,128], index: 4, kind: input, shape index: {}]
  %s5 = inlined_call_operand.hbm [shape: f32[128,128], index: 5, kind: input, shape index: {}]
  %s6 = inlined_call_operand.hbm [shape: f32[2,8,128], index: 6, kind: output, shape index: {}]
  %s7 = sld [smem:[#allocation0]]
  $region66: #{tpu_custom_call.1} parent=0
    _
  %s9 = ssub.s32 1, %s7
  %s10 = scalar_select 0, %s9, %s7
  $region1: #{tpu_custom_call.1} parent=0
    #allocation6 [shape = 'u8[8192]{0}', space=vmem, size = 0x2000, scoped, tag = 'input window, operand 0, single buffered']
    #allocation7 [shape = 's32[1]{0}', space=sflag, size = 0x4, scoped, tag = 'scoped memory for tpu_custom_call.1']
    #allocation8 [shape = 's32[1]{0}', space=sflag, size = 0x4, scoped, tag = 'scoped memory for tpu_custom_call.1']
    #allocation9 [shape = 'u8[8192]{0}', space=vmem, size = 0x2000, scoped, tag = 'input window, operand 1, single buffered']
    #allocation10 [shape = 's32[1]{0}', space=sflag, size = 0x4, scoped, tag = 'scoped memory for tpu_custom_call.1']
    #allocation11 [shape = 'u8[8192]{0}', space=vmem, size = 0x2000, scoped, tag = 'input window, operand 2, single buffered']
    #allocation12 [shape = 'u8[65536]{0}', space=vmem, size = 0x10000, scoped, tag = 'input window, operand 3, single buffered']
    #allocation13 [shape = 's32[1]{0}', space=sflag, size = 0x4, scoped, tag = 'scoped memory for tpu_custom_call.1']
    #allocation14 [shape = 'u8[65536]{0}', space=vmem, size = 0x10000, scoped, tag = 'input window, operand 4, single buffered']
    #allocation15 [shape = 'u8[65536]{0}', space=vmem, size = 0x10000, scoped, tag = 'input window, operand 5, single buffered']
    #allocation16 [shape = 's32[1]{0}', space=sflag, size = 0x4, scoped, tag = 'scoped memory for tpu_custom_call.1']
    #allocation17 [shape = 'u8[8192]{0}', space=vmem, size = 0x2000, scoped, tag = 'output window, operand 0, single buffered']
    %11 = vsyncpa [#allocation7], 0
    %12 = vsyncpa [#allocation10], 0
    %13 = vsyncpa [#allocation13], 0
    %14 = vsyncpa [#allocation16], 0
    %15 = vsyncpa [#allocation8], 0
    // Predicated region
    $region2: #{tpu_custom_call.1} parent=1 // pred_check
      _
    $region3: #{tpu_custom_call.1} parent=1 // pred_check_branch
      %17 = sbr.rel (0) target = $region5
    $region4: #{tpu_custom_call.1} parent=1 // pred_region
      %19 = vsyncadd [#allocation7], 0
      %s20 = sshll.u32 %s0, 4
      %s21 = int_to_ptr.hbm [resolvable:$true] %s20
      %s22 = sshll.u32 [#allocation6], 4
      %s23 = int_to_ptr.vmem [resolvable:$true] %s22
      %28 = dma.hbm_to_vmem [thread:$0]  %s21, 256, %s23, [#allocation7], 128, 128, 8
    $region5: #{tpu_custom_call.1} parent=1 // pred_fallthru
      _
    // Predicated region
    $region6: #{tpu_custom_call.1} parent=1 // pred_check
      _
    $region7: #{tpu_custom_call.1} parent=1 // pred_check_branch
      %30 = sbr.rel (0) target = $region9
    $region8: #{tpu_custom_call.1} parent=1 // pred_region
      %32 = vsyncadd [#allocation10], 0
      %s33 = sshll.u32 %s1, 4
      %s34 = int_to_ptr.hbm [resolvable:$true] %s33
      %s35 = sshll.u32 [#allocation9], 4
      %s36 = int_to_ptr.vmem [resolvable:$true] %s35
      %41 = dma.hbm_to_vmem [thread:$0]  %s34, 256, %s36, [#allocation10], 128, 128, 8
    $region9: #{tpu_custom_call.1} parent=1 // pred_fallthru
      _
    // Predicated region
    $region10: #{tpu_custom_call.1} parent=1 // pred_check
      _
    $region11: #{tpu_custom_call.1} parent=1 // pred_check_branch
      %43 = sbr.rel (0) target = $region13
    $region12: #{tpu_custom_call.1} parent=1 // pred_region
      %45 = vsyncadd [#allocation10], 0
      %s46 = sshll.u32 %s2, 4
      %s47 = int_to_ptr.hbm [resolvable:$true] %s46
      %s48 = sshll.u32 [#allocation11], 4
      %s49 = int_to_ptr.vmem [resolvable:$true] %s48
      %54 = dma.hbm_to_vmem [thread:$0]  %s47, 256, %s49, [#allocation10], 128, 128, 8
    $region13: #{tpu_custom_call.1} parent=1 // pred_fallthru
      _
    // Predicated region
    $region14: #{tpu_custom_call.1} parent=1 // pred_check
      _
    $region15: #{tpu_custom_call.1} parent=1 // pred_check_branch
      %56 = sbr.rel (0) target = $region17
    $region16: #{tpu_custom_call.1} parent=1 // pred_region
      %58 = vsyncadd [#allocation13], 0
      %s59 = sshll.u32 %s3, 4
      %s60 = int_to_ptr.hbm [resolvable:$true] %s59
      %s61 = sshll.u32 [#allocation12], 4
      %s62 = int_to_ptr.vmem [resolvable:$true] %s61
      %67 = dma.hbm_to_vmem [thread:$0]  %s60, 2048, %s62, [#allocation13], 128, 128, 8
    $region17: #{tpu_custom_call.1} parent=1 // pred_fallthru
      _
    // Predicated region
    $region18: #{tpu_custom_call.1} parent=1 // pred_check
      _
    $region19: #{tpu_custom_call.1} parent=1 // pred_check_branch
      %69 = sbr.rel (0) target = $region21
    $region20: #{tpu_custom_call.1} parent=1 // pred_region
      %71 = vsyncadd [#allocation13], 0
      %s72 = sshll.u32 %s4, 4
      %s73 = int_to_ptr.hbm [resolvable:$true] %s72
      %s74 = sshll.u32 [#allocation14], 4
      %s75 = int_to_ptr.vmem [resolvable:$true] %s74
      %80 = dma.hbm_to_vmem [thread:$0]  %s73, 2048, %s75, [#allocation13], 128, 128, 8
    $region21: #{tpu_custom_call.1} parent=1 // pred_fallthru
      _
    // Predicated region
    $region22: #{tpu_custom_call.1} parent=1 // pred_check
      _
    $region23: #{tpu_custom_call.1} parent=1 // pred_check_branch
      %82 = sbr.rel (0) target = $region25
    $region24: #{tpu_custom_call.1} parent=1 // pred_region
      %84 = vsyncadd [#allocation16], 0
      %s85 = sshll.u32 %s5, 4
      %s86 = int_to_ptr.hbm [resolvable:$true] %s85
      %s87 = sshll.u32 [#allocation15], 4
      %s88 = int_to_ptr.vmem [resolvable:$true] %s87
      %93 = dma.hbm_to_vmem [thread:$0]  %s86, 2048, %s88, [#allocation16], 128, 128, 8
    $region25: #{tpu_custom_call.1} parent=1 // pred_fallthru
      _
    // Predicated region
    $region26: #{tpu_custom_call.1} parent=1 // pred_check
      _
    $region27: #{tpu_custom_call.1} parent=1 // pred_check_branch
      %95 = sbr.rel (0) target = $region29
    $region28: #{tpu_custom_call.1} parent=1 // pred_region
      %97 = dma.done [#allocation7], 256
    $region29: #{tpu_custom_call.1} parent=1 // pred_fallthru
      _
    // Predicated region
    $region30: #{tpu_custom_call.1} parent=1 // pred_check
      _
    $region31: #{tpu_custom_call.1} parent=1 // pred_check_branch
      %99 = sbr.rel (0) target = $region33
    $region32: #{tpu_custom_call.1} parent=1 // pred_region
      %101 = dma.done [#allocation10], 256
    $region33: #{tpu_custom_call.1} parent=1 // pred_fallthru
      _
    // Predicated region
    $region34: #{tpu_custom_call.1} parent=1 // pred_check
      _
    $region35: #{tpu_custom_call.1} parent=1 // pred_check_branch
      %103 = sbr.rel (0) target = $region37
    $region36: #{tpu_custom_call.1} parent=1 // pred_region
      %105 = dma.done [#allocation10], 256
    $region37: #{tpu_custom_call.1} parent=1 // pred_fallthru
      _
    // Predicated region
    $region38: #{tpu_custom_call.1} parent=1 // pred_check
      _
    $region39: #{tpu_custom_call.1} parent=1 // pred_check_branch
      %107 = sbr.rel (0) target = $region41
    $region40: #{tpu_custom_call.1} parent=1 // pred_region
      %109 = dma.done [#allocation13], 2048
    $region41: #{tpu_custom_call.1} parent=1 // pred_fallthru
      _
    // Predicated region
    $region42: #{tpu_custom_call.1} parent=1 // pred_check
      _
    $region43: #{tpu_custom_call.1} parent=1 // pred_check_branch
      %111 = sbr.rel (0) target = $region45
    $region44: #{tpu_custom_call.1} parent=1 // pred_region
      %113 = dma.done [#allocation13], 2048
    $region45: #{tpu_custom_call.1} parent=1 // pred_fallthru
      _
    // Predicated region
    $region46: #{tpu_custom_call.1} parent=1 // pred_check
      _
    $region47: #{tpu_custom_call.1} parent=1 // pred_check_branch
      %115 = sbr.rel (0) target = $region49
    $region48: #{tpu_custom_call.1} parent=1 // pred_region
      %117 = dma.done [#allocation16], 2048
    $region49: #{tpu_custom_call.1} parent=1 // pred_fallthru
      _
    %p118 = scmp.eq.s32.totalorder 0, 0
    // Predicated region
    $region50: #{tpu_custom_call.1} parent=1 // pred_check
      %p119 = pneg %p118
    $region51: #{tpu_custom_call.1} parent=1 // pred_check_branch
      %121 = sbr.rel (%p119) target = $region53
    $region52: #{tpu_custom_call.1} parent=1 // pred_region
      %vm122 = vcmask 7168
      %123 = vst.msk [vmem:[#allocation3] sm:$0xff] %vm122, -inf
      %124 = vst.msk [vmem:[#allocation3 + $0x8] sm:$0xff] %vm122, -inf
      %125 = vst.msk [vmem:[#allocation4] sm:$0xff] %vm122, 0.0
      %126 = vst.msk [vmem:[#allocation4 + $0x8] sm:$0xff] %vm122, 0.0
      %127 = vst [vmem:[#allocation5] sm:$0xff] 0.0
      %128 = vst [vmem:[#allocation5 + $0x8] sm:$0xff] 0.0
      %v129 = vld [vmem:[#allocation6] sm:$0xff]
      %v130 = vld [vmem:[#allocation6 + $0x8] sm:$0xff]
      %v131 = vld [vmem:[#allocation12] sm:$0xff]
      %v132 = vld [vmem:[#allocation12 + $0x8] sm:$0xff]
      %v133 = vld [vmem:[#allocation12 + $0x10] sm:$0xff]
      %v134 = vld [vmem:[#allocation12 + $0x18] sm:$0xff]
      %v135 = vld [vmem:[#allocation12 + $0x20] sm:$0xff]
      %v136 = vld [vmem:[#allocation12 + $0x28] sm:$0xff]
      %v137 = vld [vmem:[#allocation12 + $0x30] sm:$0xff]
      %v138 = vld [vmem:[#allocation12 + $0x38] sm:$0xff]
      %v139 = vld [vmem:[#allocation12 + $0x40] sm:$0xff]
      %v140 = vld [vmem:[#allocation12 + $0x48] sm:$0xff]
      %v141 = vld [vmem:[#allocation12 + $0x50] sm:$0xff]
      %v142 = vld [vmem:[#allocation12 + $0x58] sm:$0xff]
      %v143 = vld [vmem:[#allocation12 + $0x60] sm:$0xff]
      %v144 = vld [vmem:[#allocation12 + $0x68] sm:$0xff]
      %v145 = vld [vmem:[#allocation12 + $0x70] sm:$0xff]
      %v146 = vld [vmem:[#allocation12 + $0x78] sm:$0xff]
      %147 = vmatpush.msra.mxu0 %v146
      %148 = vmatpush.msra.mxu0 %v145
      %149 = vmatpush.msra.mxu0 %v144
      %150 = vmatpush.msra.mxu0 %v143
      %151 = vmatpush.msra.mxu0 %v142
      %152 = vmatpush.msra.mxu0 %v141
      %153 = vmatpush.msra.mxu0 %v140
      %154 = vmatpush.msra.mxu0 %v139
      %155 = vmatpush.msra.mxu0 %v138
      %156 = vmatpush.msra.mxu0 %v137
      %157 = vmatpush.msra.mxu0 %v136
      %158 = vmatpush.msra.mxu0 %v135
      %159 = vmatpush.msra.mxu0 %v134
      %160 = vmatpush.msra.mxu0 %v133
      %161 = vmatpush.msra.mxu0 %v132
      %162 = vmatpush.msra.mxu0 %v131
      %163 = vmatmul.f32.gmra.mxu0 %v129
      %v164 = vpop.f32.mrf.mxu0
      %v165 = vadd.f32 0.0, %v164
      %166 = vmatmul.f32.gmra.mxu0 %v130
      %v167 = vpop.f32.mrf.mxu0
      %v168 = vadd.f32 0.0, %v167
      %169 = vdwg.mxu0
      %170 = vst [vmem:[#allocation2] sm:$0xff] %v165
      %171 = vst [vmem:[#allocation2 + $0x8] sm:$0xff] %v168
    $region53: #{tpu_custom_call.1} parent=1 // pred_fallthru
      _
    %v172 = vld [vmem:[#allocation9] sm:$0xff]
    %v173 = vld [vmem:[#allocation9 + $0x8] sm:$0xff]
    %v174 = vld [vmem:[#allocation11] sm:$0xff]
    %v175 = vld [vmem:[#allocation11 + $0x8] sm:$0xff]
    %v176 = vld [vmem:[#allocation12] sm:$0xff]
    %v177 = vld [vmem:[#allocation12 + $0x8] sm:$0xff]
    %v178 = vld [vmem:[#allocation12 + $0x10] sm:$0xff]
    %v179 = vld [vmem:[#allocation12 + $0x18] sm:$0xff]
    %v180 = vld [vmem:[#allocation12 + $0x20] sm:$0xff]
    %v181 = vld [vmem:[#allocation12 + $0x28] sm:$0xff]
    %v182 = vld [vmem:[#allocation12 + $0x30] sm:$0xff]
    %v183 = vld [vmem:[#allocation12 + $0x38] sm:$0xff]
    %v184 = vld [vmem:[#allocation12 + $0x40] sm:$0xff]
    %v185 = vld [vmem:[#allocation12 + $0x48] sm:$0xff]
    %v186 = vld [vmem:[#allocation12 + $0x50] sm:$0xff]
    %v187 = vld [vmem:[#allocation12 + $0x58] sm:$0xff]
    %v188 = vld [vmem:[#allocation12 + $0x60] sm:$0xff]
    %v189 = vld [vmem:[#allocation12 + $0x68] sm:$0xff]
    %v190 = vld [vmem:[#allocation12 + $0x70] sm:$0xff]
    %v191 = vld [vmem:[#allocation12 + $0x78] sm:$0xff]
    %192 = vmatpush.msra.mxu0 %v191
    %193 = vmatpush.msra.mxu0 %v190
    %194 = vmatpush.msra.mxu0 %v189
    %195 = vmatpush.msra.mxu0 %v188
    %196 = vmatpush.msra.mxu0 %v187
    %197 = vmatpush.msra.mxu0 %v186
    %198 = vmatpush.msra.mxu0 %v185
    %199 = vmatpush.msra.mxu0 %v184
    %200 = vmatpush.msra.mxu0 %v183
    %201 = vmatpush.msra.mxu0 %v182
    %202 = vmatpush.msra.mxu0 %v181
    %203 = vmatpush.msra.mxu0 %v180
    %204 = vmatpush.msra.mxu0 %v179
    %205 = vmatpush.msra.mxu0 %v178
    %206 = vmatpush.msra.mxu0 %v177
    %207 = vmatpush.msra.mxu0 %v176
    %208 = vmatmul.f32.gmra.mxu0 %v172
    %v209 = vpop.f32.mrf.mxu0
    %v210 = vadd.f32 0.0, %v209
    %211 = vmatmul.f32.gmra.mxu0 %v173
    %v212 = vpop.f32.mrf.mxu0
    %v213 = vadd.f32 0.0, %v212
    %214 = vdwg.mxu0
    %v215 = vld [vmem:[#allocation14] sm:$0xff]
    %v216 = vld [vmem:[#allocation14 + $0x8] sm:$0xff]
    %v217 = vld [vmem:[#allocation14 + $0x10] sm:$0xff]
    %v218 = vld [vmem:[#allocation14 + $0x18] sm:$0xff]
    %v219 = vld [vmem:[#allocation14 + $0x20] sm:$0xff]
    %v220 = vld [vmem:[#allocation14 + $0x28] sm:$0xff]
    %v221 = vld [vmem:[#allocation14 + $0x30] sm:$0xff]
    %v222 = vld [vmem:[#allocation14 + $0x38] sm:$0xff]
    %v223 = vld [vmem:[#allocation14 + $0x40] sm:$0xff]
    %v224 = vld [vmem:[#allocation14 + $0x48] sm:$0xff]
    %v225 = vld [vmem:[#allocation14 + $0x50] sm:$0xff]
    %v226 = vld [vmem:[#allocation14 + $0x58] sm:$0xff]
    %v227 = vld [vmem:[#allocation14 + $0x60] sm:$0xff]
    %v228 = vld [vmem:[#allocation14 + $0x68] sm:$0xff]
    %v229 = vld [vmem:[#allocation14 + $0x70] sm:$0xff]
    %v230 = vld [vmem:[#allocation14 + $0x78] sm:$0xff]
    %231 = vmatpush.msra.mxu0 %v230
    %232 = vmatpush.msra.mxu0 %v229
    %233 = vmatpush.msra.mxu0 %v228
    %234 = vmatpush.msra.mxu0 %v227
    %235 = vmatpush.msra.mxu0 %v226
    %236 = vmatpush.msra.mxu0 %v225
    %237 = vmatpush.msra.mxu0 %v224
    %238 = vmatpush.msra.mxu0 %v223
    %239 = vmatpush.msra.mxu0 %v222
    %240 = vmatpush.msra.mxu0 %v221
    %241 = vmatpush.msra.mxu0 %v220
    %242 = vmatpush.msra.mxu0 %v219
    %243 = vmatpush.msra.mxu0 %v218
    %244 = vmatpush.msra.mxu0 %v217
    %245 = vmatpush.msra.mxu0 %v216
    %246 = vmatpush.msra.mxu0 %v215
    %247 = vmatmul.f32.gmra.mxu0 %v210
    %v248 = vpop.f32.mrf.mxu0
    %v249 = vadd.f32 0.0, %v248
    %250 = vmatmul.f32.gmra.mxu0 %v213
    %v251 = vpop.f32.mrf.mxu0
    %v252 = vadd.f32 0.0, %v251
    %253 = vdwg.mxu0
    %v254 = vld [vmem:[#allocation15] sm:$0xff]
    %v255 = vld [vmem:[#allocation15 + $0x8] sm:$0xff]
    %v256 = vld [vmem:[#allocation15 + $0x10] sm:$0xff]
    %v257 = vld [vmem:[#allocation15 + $0x18] sm:$0xff]
    %v258 = vld [vmem:[#allocation15 + $0x20] sm:$0xff]
    %v259 = vld [vmem:[#allocation15 + $0x28] sm:$0xff]
    %v260 = vld [vmem:[#allocation15 + $0x30] sm:$0xff]
    %v261 = vld [vmem:[#allocation15 + $0x38] sm:$0xff]
    %v262 = vld [vmem:[#allocation15 + $0x40] sm:$0xff]
    %v263 = vld [vmem:[#allocation15 + $0x48] sm:$0xff]
    %v264 = vld [vmem:[#allocation15 + $0x50] sm:$0xff]
    %v265 = vld [vmem:[#allocation15 + $0x58] sm:$0xff]
    %v266 = vld [vmem:[#allocation15 + $0x60] sm:$0xff]
    %v267 = vld [vmem:[#allocation15 + $0x68] sm:$0xff]
    %v268 = vld [vmem:[#allocation15 + $0x70] sm:$0xff]
    %v269 = vld [vmem:[#allocation15 + $0x78] sm:$0xff]
    %270 = vmatpush.msra.mxu0 %v269
    %271 = vmatpush.msra.mxu0 %v268
    %272 = vmatpush.msra.mxu0 %v267
    %273 = vmatpush.msra.mxu0 %v266
    %274 = vmatpush.msra.mxu0 %v265
    %275 = vmatpush.msra.mxu0 %v264
    %276 = vmatpush.msra.mxu0 %v263
    %277 = vmatpush.msra.mxu0 %v262
    %278 = vmatpush.msra.mxu0 %v261
    %279 = vmatpush.msra.mxu0 %v260
    %280 = vmatpush.msra.mxu0 %v259
    %281 = vmatpush.msra.mxu0 %v258
    %282 = vmatpush.msra.mxu0 %v257
    %283 = vmatpush.msra.mxu0 %v256
    %284 = vmatpush.msra.mxu0 %v255
    %285 = vmatpush.msra.mxu0 %v254
    %286 = vmatmul.f32.gmra.mxu0 %v174
    %v287 = vpop.f32.mrf.mxu0
    %v288 = vadd.f32 0.0, %v287
    %289 = vmatmul.f32.gmra.mxu0 %v175
    %v290 = vpop.f32.mrf.mxu0
    %v291 = vadd.f32 0.0, %v290
    %292 = vdwg.mxu0
    %v293 = vld [vmem:[#allocation2] sm:$0xff]
    %v294 = vld [vmem:[#allocation2 + $0x8] sm:$0xff]
    %295 = vmatpush.xpose.msra.mxu0 0.0
    %296 = vmatpush.xpose.msra.mxu0 0.0
    %297 = vmatpush.xpose.msra.mxu0 0.0
    %298 = vmatpush.xpose.msra.mxu0 0.0
    %299 = vmatpush.xpose.msra.mxu0 0.0
    %300 = vmatpush.xpose.msra.mxu0 0.0
    %301 = vmatpush.xpose.msra.mxu0 0.0
    %302 = vmatpush.xpose.msra.mxu0 0.0
    %303 = vmatpush.xpose.msra.mxu0 0.0
    %304 = vmatpush.xpose.msra.mxu0 0.0
    %305 = vmatpush.xpose.msra.mxu0 0.0
    %306 = vmatpush.xpose.msra.mxu0 0.0
    %307 = vmatpush.xpose.msra.mxu0 0.0
    %308 = vmatpush.xpose.msra.mxu0 0.0
    %309 = vmatpush.xpose.msra.mxu0 0.0
    %310 = vmatpush.xpose.msra.mxu0 %v249
    %311 = vmatmul.f32.gmra.mxu0 %v293
    %v312 = vpop.f32.mrf.mxu0
    %v313 = vadd.f32 0.0, %v312
    %314 = vdwg.mxu0
    %315 = vmatpush.xpose.msra.mxu0 0.0
    %316 = vmatpush.xpose.msra.mxu0 0.0
    %317 = vmatpush.xpose.msra.mxu0 0.0
    %318 = vmatpush.xpose.msra.mxu0 0.0
    %319 = vmatpush.xpose.msra.mxu0 0.0
    %320 = vmatpush.xpose.msra.mxu0 0.0
    %321 = vmatpush.xpose.msra.mxu0 0.0
    %322 = vmatpush.xpose.msra.mxu0 0.0
    %323 = vmatpush.xpose.msra.mxu0 0.0
    %324 = vmatpush.xpose.msra.mxu0 0.0
    %325 = vmatpush.xpose.msra.mxu0 0.0
    %326 = vmatpush.xpose.msra.mxu0 0.0
    %327 = vmatpush.xpose.msra.mxu0 0.0
    %328 = vmatpush.xpose.msra.mxu0 0.0
    %329 = vmatpush.xpose.msra.mxu0 0.0
    %330 = vmatpush.xpose.msra.mxu0 %v252
    %331 = vmatmul.f32.gmra.mxu0 %v294
    %v332 = vpop.f32.mrf.mxu0
    %v333 = vadd.f32 0.0, %v332
    %334 = vdwg.mxu0
    %v335 = vld [vmem:[#allocation3] sm:$0xff]
    %v336 = vld [vmem:[#allocation3 + $0x8] sm:$0xff]
    %vm337 = vcmask 64512
    %v338 = vsel %vm337, %v313, -inf
    %339 = vmax.xlane.f32.xlu0 %v338
    %v340 = vpop.xlane.xlu0 %339
    %v341 = vsel %vm337, %v333, -inf
    %342 = vmax.xlane.f32.xlu0 %v341
    %v343 = vpop.xlane.xlu0 %342
    %v344 = vmax.f32 %v335, %v340
    %v345 = vmax.f32 %v336, %v343
    %v346 = vsub.f32 %v335, %v344
    %v347 = vsub.f32 %v336, %v345
    %v348 = vmul.f32 %v346, 1.442695
    %v349 = vpow.pop %v348
    %v350 = vmul.f32 %v347, 1.442695
    %v351 = vpow.pop %v350
    %353 = vset.pattern.permute.xlu0 0
    %354 = vperm.xlu0 %353, %v344
    %v355 = vpop.permute.xlu0 %354
    %358 = vset.pattern.permute.xlu0 0
    %359 = vperm.xlu0 %358, %v345
    %v360 = vpop.permute.xlu0 %359
    %v362 = vsub.f32 %v313, %v355
    %v363 = vsub.f32 %v333, %v360
    %v364 = vmul.f32 %v362, 1.442695
    %v365 = vpow.pop %v364
    %v366 = vmul.f32 %v363, 1.442695
    %v367 = vpow.pop %v366
    %v368 = vld [vmem:[#allocation4] sm:$0xff]
    %v369 = vld [vmem:[#allocation4 + $0x8] sm:$0xff]
    %v370 = vmul.f32 %v349, %v368
    %v371 = vmul.f32 %v351, %v369
    %v372 = vsel %vm337, %v365, 0.0
    %373 = vadd.xlane.f32.xlu0 %v372
    %v374 = vpop.xlane.xlu0 %373
    %v375 = vsel %vm337, %v367, 0.0
    %376 = vadd.xlane.f32.xlu0 %v375
    %v377 = vpop.xlane.xlu0 %376
    %v378 = vadd.f32 %v370, %v374
    %v379 = vadd.f32 %v371, %v377
    %vm380 = vcmask 7168
    %381 = vst.msk [vmem:[#allocation4] sm:$0xff] %vm380, %v378
    %382 = vst.msk [vmem:[#allocation4 + $0x8] sm:$0xff] %vm380, %v379
    %v383 = vld [vmem:[#allocation5] sm:$0xff]
    %v384 = vld [vmem:[#allocation5 + $0x8] sm:$0xff]
    %386 = vset.pattern.permute.xlu0 0
    %387 = vperm.xlu0 %386, %v349
    %v388 = vpop.permute.xlu0 %387
    %391 = vset.pattern.permute.xlu0 0
    %392 = vperm.xlu0 %391, %v351
    %v393 = vpop.permute.xlu0 %392
    %v395 = vmul.f32 %v388, %v383
    %v396 = vmul.f32 %v393, %v384
    %v398 = vsel %vm337, %v365, 0
    %400 = vmatpush.msra.mxu0 0.0
    %401 = vmatpush.msra.mxu0 0.0
    %402 = vmatpush.msra.mxu0 0.0
    %403 = vmatpush.msra.mxu0 0.0
    %404 = vmatpush.msra.mxu0 0.0
    %405 = vmatpush.msra.mxu0 0.0
    %406 = vmatpush.msra.mxu0 0.0
    %407 = vmatpush.msra.mxu0 0.0
    %408 = vmatpush.msra.mxu0 0.0
    %409 = vmatpush.msra.mxu0 0.0
    %410 = vmatpush.msra.mxu0 0.0
    %411 = vmatpush.msra.mxu0 0.0
    %412 = vmatpush.msra.mxu0 0.0
    %413 = vmatpush.msra.mxu0 0.0
    %414 = vmatpush.msra.mxu0 0.0
    %415 = vmatpush.msra.mxu0 %v288
    %416 = vmatmul.f32.gmra.mxu0 %v398
    %v417 = vpop.f32.mrf.mxu0
    %v418 = vadd.f32 0.0, %v417
    %419 = vdwg.mxu0
    %v421 = vsel %vm337, %v367, 0
    %423 = vmatpush.msra.mxu0 0.0
    %424 = vmatpush.msra.mxu0 0.0
    %425 = vmatpush.msra.mxu0 0.0
    %426 = vmatpush.msra.mxu0 0.0
    %427 = vmatpush.msra.mxu0 0.0
    %428 = vmatpush.msra.mxu0 0.0
    %429 = vmatpush.msra.mxu0 0.0
    %430 = vmatpush.msra.mxu0 0.0
    %431 = vmatpush.msra.mxu0 0.0
    %432 = vmatpush.msra.mxu0 0.0
    %433 = vmatpush.msra.mxu0 0.0
    %434 = vmatpush.msra.mxu0 0.0
    %435 = vmatpush.msra.mxu0 0.0
    %436 = vmatpush.msra.mxu0 0.0
    %437 = vmatpush.msra.mxu0 0.0
    %438 = vmatpush.msra.mxu0 %v291
    %439 = vmatmul.f32.gmra.mxu0 %v421
    %v440 = vpop.f32.mrf.mxu0
    %v441 = vadd.f32 0.0, %v440
    %442 = vdwg.mxu0
    %v443 = vadd.f32 %v395, %v418
    %v444 = vadd.f32 %v396, %v441
    %445 = vst [vmem:[#allocation5] sm:$0xff] %v443
    %446 = vst [vmem:[#allocation5 + $0x8] sm:$0xff] %v444
    %447 = vst.msk [vmem:[#allocation3] sm:$0xff] %vm380, %v344
    %448 = vst.msk [vmem:[#allocation3 + $0x8] sm:$0xff] %vm380, %v345
    // Predicated region
    $region54: #{tpu_custom_call.1} parent=1 // pred_check
      %p449 = pneg %p118
    $region55: #{tpu_custom_call.1} parent=1 // pred_check_branch
      %451 = sbr.rel (%p449) target = $region57
    $region56: #{tpu_custom_call.1} parent=1 // pred_region
      %v452 = vld [vmem:[#allocation4] sm:$0xff]
      %v453 = vld [vmem:[#allocation4 + $0x8] sm:$0xff]
      %v454 = vrcp.pop %v452
      %v455 = vmul.f32 %v452, %v454
      %v456 = vsub.f32 1.0, %v455
      %v457 = vmul.f32 %v454, %v456
      %v458 = vadd.f32 %v454, %v457
      %vm459 = vweird.f32 %v452
      %vm460 = vweird.f32 %v454
      %vm461 = vmor %vm459, %vm460
      %v462 = vsel %vm461, %v454, %v458
      %v463 = vand.u32 2147483647, %v452
      %vm464 = vcmp.eq.f32.partialorder %v463, 8.507059e+37
      %v465 = vand.u32 %v452, 2147483648
      %v466 = vor.u32 1.1754944e-38, %v465
      %v467 = vsel %vm464, %v466, %v462
      %v468 = vrcp.pop %v453
      %v469 = vmul.f32 %v453, %v468
      %v470 = vsub.f32 1.0, %v469
      %v471 = vmul.f32 %v468, %v470
      %v472 = vadd.f32 %v468, %v471
      %vm473 = vweird.f32 %v453
      %vm474 = vweird.f32 %v468
      %vm475 = vmor %vm473, %vm474
      %v476 = vsel %vm475, %v468, %v472
      %v477 = vand.u32 2147483647, %v453
      %vm478 = vcmp.eq.f32.partialorder %v477, 8.507059e+37
      %v479 = vand.u32 %v453, 2147483648
      %v480 = vor.u32 1.1754944e-38, %v479
      %v481 = vsel %vm478, %v480, %v476
      %v482 = vld [vmem:[#allocation5] sm:$0xff]
      %v483 = vld [vmem:[#allocation5 + $0x8] sm:$0xff]
      %485 = vset.pattern.permute.xlu0 0
      %486 = vperm.xlu0 %485, %v467
      %v487 = vpop.permute.xlu0 %486
      %490 = vset.pattern.permute.xlu0 0
      %491 = vperm.xlu0 %490, %v481
      %v492 = vpop.permute.xlu0 %491
      %v494 = vmul.f32 %v482, %v487
      %v495 = vmul.f32 %v483, %v492
      %496 = vst [vmem:[#allocation17] sm:$0xff] %v494
      %497 = vst [vmem:[#allocation17 + $0x8] sm:$0xff] %v495
    $region57: #{tpu_custom_call.1} parent=1 // pred_fallthru
      _
    // Predicated region
    $region58: #{tpu_custom_call.1} parent=1 // pred_check
      _
    $region59: #{tpu_custom_call.1} parent=1 // pred_check_branch
      %499 = sbr.rel (0) target = $region61
    $region60: #{tpu_custom_call.1} parent=1 // pred_region
      %501 = vsyncadd [#allocation8], 0
      %s502 = sshll.u32 [#allocation17], 4
      %s503 = int_to_ptr.vmem [resolvable:$true] %s502
      %s504 = sshll.u32 %s6, 4
      %s505 = int_to_ptr.hbm [resolvable:$true] %s504
      %510 = dma.vmem_to_hbm [thread:$0]  %s503, 256, %s505, [#allocation8], 128, 128, 8
    $region61: #{tpu_custom_call.1} parent=1 // pred_fallthru
      _
    // Predicated region
    $region62: #{tpu_custom_call.1} parent=1 // pred_check
      _
    $region63: #{tpu_custom_call.1} parent=1 // pred_check_branch
      %512 = sbr.rel (0) target = $region65
    $region64: #{tpu_custom_call.1} parent=1 // pred_region
      %514 = dma.done [#allocation8], 256
    $region65: #{tpu_custom_call.1} parent=1 // pred_fallthru
      _
    %515 = vsyncpa [#allocation7], 1
    %516 = vsyncpa [#allocation10], 1
    %517 = vsyncpa [#allocation13], 1
    %518 = vsyncpa [#allocation16], 1
    %519 = vsyncpa [#allocation8], 1

</llo_original>
